<compile_context>
chip_gen: v5e
topology: v5e:2x2
jax: 0.10.0
libtpu: 0.0.40
codegen_flags: <defaults>
</compile_context>

<pallas_src>
import jax
import jax.numpy as jnp
import numpy as np
from jax.experimental import pallas as pl
from jax.experimental.pallas import tpu as pltpu


# -----------------------------------------------------------------------------
# Kernel 1: pre-BN result + per-channel moments, streaming att query-row tiles.
# -----------------------------------------------------------------------------
def snl_main_kernel(g_ref, att_ref, w1_ref, w2_ref,
                    pre_ref, sum_ref, sq_ref):
    # g_ref   : (Cp, N)   bf16  per-batch resident (block index constant over q)
    # att_ref : (TQ, N)   bf16  query-row tile (streamed / double-buffered)
    # w1_ref  : (Cin, Cp) bf16  w_1 1x1-conv weight
    # w2_ref  : (Cin, Cp) bf16  w_2 1x1-conv weight
    # pre_ref : (Cin, TQ) bf16  pre-BN output tile (lane-dense)
    # sum_ref : (Cin, 1)  f32   per-(b, channel) sum accumulator
    # sq_ref  : (Cin, 1)  f32   per-(b, channel) sum-of-squares accumulator
    q = pl.program_id(1)
    tq = att_ref.shape[0]

    @pl.when(q == 0)
    def _init():
        sum_ref[...] = jnp.zeros_like(sum_ref)
        sq_ref[...] = jnp.zeros_like(sq_ref)

    start = pl.multiple_of(q * tq, tq)
    g_tile = g_ref[:, pl.ds(start, tq)]                            # (Cp, TQ) bf16

    # x1 = W1 @ g                                  -> (Cin, TQ)
    x1 = jnp.dot(w1_ref[...], g_tile, preferred_element_type=jnp.float32)

    # ag[p, t] = sum_n g[p, n] * att[t, n]  (contract over key dim N) -> (Cp, TQ)
    ag = jax.lax.dot_general(g_ref[...], att_ref[...],
                             dimension_numbers=(((1,), (1,)), ((), ())),
                             preferred_element_type=jnp.float32)

    # x2 = W2 @ ag                                 -> (Cin, TQ)
    x2 = jnp.dot(w2_ref[...], ag.astype(jnp.bfloat16),
                 preferred_element_type=jnp.float32)

    pre = x1 - x2                                                  # f32
    pre_ref[...] = pre.astype(pre_ref.dtype)                       # bf16 to HBM

    # Per-channel moments over this tile's lanes (BN restructured for tiling).
    # Accumulated in f32 from the f32 value (before the bf16 store cast).
    sum_ref[...] += jnp.sum(pre, axis=1, keepdims=True)
    sq_ref[...] += jnp.sum(pre * pre, axis=1, keepdims=True)


# -----------------------------------------------------------------------------
# Kernel 2: folded BN affine + residual, large lane-dense elementwise blocks.
# -----------------------------------------------------------------------------
def bn_residual_kernel(scale_ref, shift_ref, pre_ref, x_ref, o_ref):
    # out = pre * scale + shift + residual, with scale = gamma*rsqrt(var+eps),
    # shift = beta - mean*scale folded in the wrapper.
    # relu branch skipped: module default relu=False.
    o_ref[...] = (pre_ref[...].astype(jnp.float32) * scale_ref[...]
                  + shift_ref[...] + x_ref[...])


# -----------------------------------------------------------------------------
# Generation-aware VMEM budgeting / tile selection.
# -----------------------------------------------------------------------------
def _tpu_vmem_capacity_bytes():
    try:
        cap = int(getattr(pltpu.get_tpu_info(), "vmem_capacity_bytes", 0))
        if cap >= (32 << 20):
            return cap
    except Exception:
        pass
    return 64 << 20  # conservative fallback (v7x per-core capacity)


def _pick_tile(n, bytes_per_col, avail_bytes):
    """Largest multiple-of-128 divisor of n whose streamed (double-buffered)
    columns fit in avail_bytes; 128 is the minimum lane-legal tile."""
    if n % 128 != 0:
        # TODO(synk): pad N (and mask the BN moments) instead of one full tile.
        return n
    best = 128
    t = 256
    while t <= n:
        if n % t == 0 and t * bytes_per_col <= avail_bytes:
            best = t
        t += 128
    return best


# -----------------------------------------------------------------------------
# Forward wrapper.
# -----------------------------------------------------------------------------
def snl_forward(x_nchw, att, Wg, W1, W2, gamma, beta, *, eps=1e-5, tq=None):
    """SNLUnit.forward.  x_nchw: (B, Cin, H, W), att: (B, H*W, H*W),
    Wg: (Cp, Cin), W1: (Cin, Cp), W2: (Cin, Cp).  Returns (B, Cin, H, W)."""
    B, Cin, H, W = x_nchw.shape
    Cp = Wg.shape[0]
    N = H * W
    x = x_nchw.reshape(B, Cin, N).astype(jnp.float32)   # lane-dense, no transpose

    # Hoist the g 1x1 conv: g = Wg @ x per batch, stored bf16 (resident operand
    # of kernel 1) -> attention contraction happens in Cp space.
    g = jnp.einsum('pc,bcn->bpn', Wg.astype(jnp.float32), x).astype(jnp.bfloat16)

    # bf16 streams for the bandwidth-bound att bmm (f32 MXU accumulation).
    att_bf16 = att.reshape(B, N, N).astype(jnp.bfloat16)
    w1_bf = W1.astype(jnp.bfloat16)
    w2_bf = W2.astype(jnp.bfloat16)

    # --- generation-aware VMEM budget / tiling --------------------------------
    cap = _tpu_vmem_capacity_bytes()
    budget = int(cap * 0.80)          # given to the tile picker
    vmem_limit = int(cap * 0.95)      # Mosaic scoped-VMEM limit

    lane_pad = 128
    # Per-batch resident / per-step constant VMEM of kernel 1 (double-buffered
    # by the default pipeline).  NOTE: pipeline_mode=pl.Buffered(1) on the g
    # block would save one g buffer on v7x; kept at the default for portability.
    resident1 = (2 * Cp * N * 2                 # g (bf16)
                 + 2 * 2 * Cin * Cp * 2         # W1, W2 (bf16)
                 + 2 * 2 * Cin * lane_pad * 4   # sum / sumsq outputs (lane-padded)
                 + (2 << 20))                   # compiler slack
    # Streamed bytes per query column: att tile (bf16) + pre output tile (bf16).
    col1 = 2 * (N * 2) + 2 * (Cin * 2)
    if tq is None:
        tq = _pick_tile(N, col1, max(budget - resident1, 0))
    assert N % tq == 0, "spatial size must be divisible by the query tile"
    nq = N // tq

    cost = pl.CostEstimate(
        flops=int(2 * B * N * (Cp * N + 2 * Cin * Cp)),
        transcendentals=0,
        bytes_accessed=int(B * N * N * 2 + B * Cp * N * 2 + B * Cin * N * 2
                           + 4 * Cin * Cp * 2 + 4 * B * Cin * 4))

    # --- kernel 1: pre-BN result + BN moments ---------------------------------
    pre, sums, sqs = pl.pallas_call(
        snl_main_kernel,
        out_shape=(
            jax.ShapeDtypeStruct((B, Cin, N), jnp.bfloat16),   # pre-BN result
            jax.ShapeDtypeStruct((B, Cin, 1), jnp.float32),    # per-b channel sums
            jax.ShapeDtypeStruct((B, Cin, 1), jnp.float32),    # per-b channel sumsq
        ),
        grid_spec=pltpu.PrefetchScalarGridSpec(
            num_scalar_prefetch=0,
            grid=(B, nq),
            in_specs=[
                pl.BlockSpec((None, Cp, N), lambda b, q: (b, 0, 0)),   # g (per-b resident)
                pl.BlockSpec((None, tq, N), lambda b, q: (b, q, 0)),   # att tile (streamed)
                pl.BlockSpec((Cin, Cp), lambda b, q: (0, 0)),          # W1
                pl.BlockSpec((Cin, Cp), lambda b, q: (0, 0)),          # W2
            ],
            out_specs=[
                pl.BlockSpec((None, Cin, tq), lambda b, q: (b, 0, q)),  # pre tile
                pl.BlockSpec((None, Cin, 1), lambda b, q: (b, 0, 0)),   # sum acc
                pl.BlockSpec((None, Cin, 1), lambda b, q: (b, 0, 0)),   # sumsq acc
            ],
        ),
        compiler_params=pltpu.CompilerParams(
            dimension_semantics=("parallel", "arbitrary"),
            vmem_limit_bytes=vmem_limit),
        cost_estimate=cost,
    )(g, att_bf16, w1_bf, w2_bf)

    # --- BatchNorm2d training-mode stats, folded to scale/shift ---------------
    count = float(B * N)
    mean = jnp.sum(sums, axis=0)[:, 0] / count                          # (Cin,)
    ex2 = jnp.sum(sqs, axis=0)[:, 0] / count                            # (Cin,)
    # TODO(synk): E[x^2]-mean^2 in f32 can cancel if |mean| >> std; fine here
    # (kaiming-init convs give near-zero channel means) under the tolerance.
    var = jnp.maximum(ex2 - mean * mean, 0.0)
    scale = (gamma * jax.lax.rsqrt(var + eps)).astype(jnp.float32)      # (Cin,)
    shift = (beta - mean * scale).astype(jnp.float32)                   # (Cin,)

    # --- kernel 2: folded BN + residual, decoupled (larger) tiling ------------
    col2 = 2 * Cin * (2 + 4 + 4)                    # pre(bf16) + x(f32) + out(f32)
    resident2 = 2 * 2 * Cin * lane_pad * 4 + (2 << 20)
    tn2 = _pick_tile(N, col2, max(budget - resident2, 0))
    nq2 = N // tn2

    out = pl.pallas_call(
        bn_residual_kernel,
        out_shape=jax.ShapeDtypeStruct((B, Cin, N), jnp.float32),
        grid_spec=pltpu.PrefetchScalarGridSpec(
            num_scalar_prefetch=0,
            grid=(B, nq2),
            in_specs=[
                pl.BlockSpec((Cin, 1), lambda b, n: (0, 0)),             # scale
                pl.BlockSpec((Cin, 1), lambda b, n: (0, 0)),             # shift
                pl.BlockSpec((None, Cin, tn2), lambda b, n: (b, 0, n)),  # pre (bf16)
                pl.BlockSpec((None, Cin, tn2), lambda b, n: (b, 0, n)),  # residual x
            ],
            out_specs=pl.BlockSpec((None, Cin, tn2), lambda b, n: (b, 0, n)),
        ),
        compiler_params=pltpu.CompilerParams(
            dimension_semantics=("parallel", "parallel"),
            vmem_limit_bytes=vmem_limit),
    )(scale.reshape(Cin, 1), shift.reshape(Cin, 1), pre, x)

    return out.reshape(B, Cin, H, W)


# -----------------------------------------------------------------------------
# Pure-JAX f32 reference of SNLUnit.forward (training-mode BN, relu=False).
# -----------------------------------------------------------------------------
def reference(x, att, Wg, W1, W2, gamma, beta, eps=1e-5):
    B, Cin, H, W_ = x.shape
    N = H * W_
    xc = x.reshape(B, Cin, N)                                           # (B, Cin, N)
    g = jnp.einsum('pc,bcn->bpn', Wg, xc)                               # (B, Cp, N)
    x1 = jnp.einsum('cp,bpn->bcn', W1, g)
    ag = jnp.einsum('bnm,bpm->bpn', att, g)                             # bmm(att, g)
    x2 = jnp.einsum('cp,bpn->bcn', W2, ag)
    out = x1 - x2
    mean = out.mean(axis=(0, 2), keepdims=True)
    var = ((out - mean) ** 2).mean(axis=(0, 2), keepdims=True)
    out = (out - mean) / jnp.sqrt(var + eps)
    out = out * gamma.reshape(1, Cin, 1) + beta.reshape(1, Cin, 1)
    out = out + xc
    return out.reshape(B, Cin, H, W_)


if __name__ == "__main__":
    B, Cin, Cp, H, W = 2, 16, 8, 16, 16      # N = 256
    N = H * W

    key = jax.random.PRNGKey(0)
    k1, k2, k3, k4, k5 = jax.random.split(key, 5)

    x = jax.random.normal(k1, (B, Cin, H, W), jnp.float32)
    att = jax.random.normal(k2, (B, N, N), jnp.float32)

    # kaiming_normal_(mode='fan_out') for 1x1 convs: std = sqrt(2 / out_channels)
    Wg = jax.random.normal(k3, (Cp, Cin), jnp.float32) * np.sqrt(2.0 / Cp)   # g : Cin -> Cp
    W1 = jax.random.normal(k4, (Cin, Cp), jnp.float32) * np.sqrt(2.0 / Cin)  # w1: Cp -> Cin
    W2 = jax.random.normal(k5, (Cin, Cp), jnp.float32) * np.sqrt(2.0 / Cin)  # w2: Cp -> Cin
    gamma = jnp.ones((Cin,), jnp.float32)    # BN weight init = 1
    beta = jnp.zeros((Cin,), jnp.float32)    # BN bias init = 0

    fwd = jax.jit(snl_forward)
    out = jax.block_until_ready(fwd(x, att, Wg, W1, W2, gamma, beta))

    ref = reference(x, att, Wg, W1, W2, gamma, beta)
    # Tolerance reflects the end-to-end bf16 streams (att, g, W1/W2, ag, pre)
    # with f32 MXU accumulation: ~1% relative error pre-BN, amplified by the
    # unit-variance normalization.  For strict f32 parity, flip the bf16 casts
    # in snl_forward / the `pre` out dtype back to float32.
    np.testing.assert_allclose(np.asarray(out), np.asarray(ref),
                               rtol=5e-2, atol=5e-2)

    print("KERNEL_OK")
</pallas_src>

<mosaic_0001>
module attributes {stable_mosaic.version = 11 : i64} {
  func.func @snl_main_kernel(%arg0: i32, %arg1: i32, %arg2: memref<1x8x256xbf16, #tpu.memory_space<vmem>>, %arg3: memref<1x256x256xbf16, #tpu.memory_space<vmem>>, %arg4: memref<16x8xbf16, #tpu.memory_space<vmem>>, %arg5: memref<16x8xbf16, #tpu.memory_space<vmem>>, %arg6: memref<1x16x256xbf16, #tpu.memory_space<vmem>>, %arg7: memref<1x16x1xf32, #tpu.memory_space<vmem>>, %arg8: memref<1x16x1xf32, #tpu.memory_space<vmem>>) attributes {dimension_semantics = [#tpu.dimension_semantics<parallel>, #tpu.dimension_semantics<arbitrary>], iteration_bounds = array<i64: 2, 1>, scalar_prefetch = 0 : i64, scratch_operands = 0 : i64, tpu.core_type = #tpu.core_type<tc>, window_params = [{transform_indices = @transform_0, window_bounds = array<i64: 1, 8, 256>}, {transform_indices = @transform_1, window_bounds = array<i64: 1, 256, 256>}, {pipeline_mode = #tpu.pipeline_mode<synchronous>, transform_indices = @transform_2, window_bounds = array<i64: 16, 8>}, {pipeline_mode = #tpu.pipeline_mode<synchronous>, transform_indices = @transform_3, window_bounds = array<i64: 16, 8>}, {transform_indices = @transform_4, window_bounds = array<i64: 1, 16, 256>}, {transform_indices = @transform_5, window_bounds = array<i64: 1, 16, 1>}, {transform_indices = @transform_6, window_bounds = array<i64: 1, 16, 1>}]} {
    %c0_i32 = arith.constant 0 : i32
    %0 = arith.cmpi eq, %arg1, %c0_i32 : i32
    %1 = arith.extui %0 : i1 to i32
    %c0_i32_0 = arith.constant 0 : i32
    %2 = arith.cmpi ne, %1, %c0_i32_0 : i32
    scf.if %2 {
      %cst_31 = arith.constant 0.000000e+00 : f32
      %40 = vector.broadcast %cst_31 : f32 to vector<16x1xf32>
      %c0_32 = arith.constant 0 : index
      %c0_33 = arith.constant 0 : index
      %c0_34 = arith.constant 0 : index
      %41 = vector.load %arg7[%c0_32, %c0_33, %c0_34] : memref<1x16x1xf32, #tpu.memory_space<vmem>>, vector<1x16x1xf32>
      %42 = vector.shape_cast %41 : vector<1x16x1xf32> to vector<16x1xf32>
      %43 = vector.shape_cast %40 : vector<16x1xf32> to vector<1x16x1xf32>
      tpu.vector_store %arg7[%c0_32, %c0_33, %c0_34], %43 {strides = array<i32>} : memref<1x16x1xf32, #tpu.memory_space<vmem>>, vector<1x16x1xf32>,
      %cst_35 = arith.constant 0.000000e+00 : f32
      %44 = vector.broadcast %cst_35 : f32 to vector<16x1xf32>
      %c0_36 = arith.constant 0 : index
      %c0_37 = arith.constant 0 : index
      %c0_38 = arith.constant 0 : index
      %45 = vector.load %arg8[%c0_36, %c0_37, %c0_38] : memref<1x16x1xf32, #tpu.memory_space<vmem>>, vector<1x16x1xf32>
      %46 = vector.shape_cast %45 : vector<1x16x1xf32> to vector<16x1xf32>
      %47 = vector.shape_cast %44 : vector<16x1xf32> to vector<1x16x1xf32>
      tpu.vector_store %arg8[%c0_36, %c0_37, %c0_38], %47 {strides = array<i32>} : memref<1x16x1xf32, #tpu.memory_space<vmem>>, vector<1x16x1xf32>,
    } else {
    }
    %c256_i32 = arith.constant 256 : i32
    %3 = arith.muli %arg1, %c256_i32 : i32
    %4 = tpu.assume_multiple %3, 256 : i32
    %c0 = arith.constant 0 : index
    %c0_1 = arith.constant 0 : index
    %5 = arith.index_cast %4 : i32 to index
    %6 = vector.load %arg2[%c0, %c0_1, %5] : memref<1x8x256xbf16, #tpu.memory_space<vmem>>, vector<1x8x256xbf16>
    %7 = vector.shape_cast %6 : vector<1x8x256xbf16> to vector<8x256xbf16>
    %c0_2 = arith.constant 0 : index
    %c0_3 = arith.constant 0 : index
    %8 = vector.load %arg4[%c0_2, %c0_3] : memref<16x8xbf16, #tpu.memory_space<vmem>>, vector<16x8xbf16>
    %cst = arith.constant dense<0.000000e+00> : vector<16x256xf32>
    %9 = tpu.matmul %8, %7, %cst {dimension_numbers = #tpu.dot_dimension_numbers<[1], [0], [0], [1], [0, 0, 1, 1], [], []>} : vector<16x8xbf16>, vector<8x256xbf16>, vector<16x256xf32> -> vector<16x256xf32>
    %c0_4 = arith.constant 0 : index
    %c0_5 = arith.constant 0 : index
    %c0_6 = arith.constant 0 : index
    %10 = vector.load %arg2[%c0_4, %c0_5, %c0_6] : memref<1x8x256xbf16, #tpu.memory_space<vmem>>, vector<1x8x256xbf16>
    %11 = vector.shape_cast %10 : vector<1x8x256xbf16> to vector<8x256xbf16>
    %c0_7 = arith.constant 0 : index
    %c0_8 = arith.constant 0 : index
    %c0_9 = arith.constant 0 : index
    %12 = vector.load %arg3[%c0_7, %c0_8, %c0_9] : memref<1x256x256xbf16, #tpu.memory_space<vmem>>, vector<1x256x256xbf16>
    %13 = vector.shape_cast %12 : vector<1x256x256xbf16> to vector<256x256xbf16>
    %cst_10 = arith.constant dense<0.000000e+00> : vector<8x256xf32>
    %14 = tpu.matmul %11, %13, %cst_10 {dimension_numbers = #tpu.dot_dimension_numbers<[1], [1], [0], [0], [0, 0, 1, 0], [], []>} : vector<8x256xbf16>, vector<256x256xbf16>, vector<8x256xf32> -> vector<8x256xf32>
    %c0_11 = arith.constant 0 : index
    %c0_12 = arith.constant 0 : index
    %15 = vector.load %arg5[%c0_11, %c0_12] : memref<16x8xbf16, #tpu.memory_space<vmem>>, vector<16x8xbf16>
    %16 = arith.truncf %14 : vector<8x256xf32> to vector<8x256xbf16>
    %cst_13 = arith.constant dense<0.000000e+00> : vector<16x256xf32>
    %17 = tpu.matmul %15, %16, %cst_13 {dimension_numbers = #tpu.dot_dimension_numbers<[1], [0], [0], [1], [0, 0, 1, 1], [], []>} : vector<16x8xbf16>, vector<8x256xbf16>, vector<16x256xf32> -> vector<16x256xf32>
    %18 = arith.subf %9, %17 : vector<16x256xf32>
    %19 = arith.truncf %18 : vector<16x256xf32> to vector<16x256xbf16>
    %c0_14 = arith.constant 0 : index
    %c0_15 = arith.constant 0 : index
    %c0_16 = arith.constant 0 : index
    %20 = vector.load %arg6[%c0_14, %c0_15, %c0_16] : memref<1x16x256xbf16, #tpu.memory_space<vmem>>, vector<1x16x256xbf16>
    %21 = vector.shape_cast %20 : vector<1x16x256xbf16> to vector<16x256xbf16>
    %22 = vector.shape_cast %19 : vector<16x256xbf16> to vector<1x16x256xbf16>
    tpu.vector_store %arg6[%c0_14, %c0_15, %c0_16], %22 {strides = array<i32>} : memref<1x16x256xbf16, #tpu.memory_space<vmem>>, vector<1x16x256xbf16>,
    %c0_17 = arith.constant 0 : index
    %c0_18 = arith.constant 0 : index
    %c0_19 = arith.constant 0 : index
    %23 = vector.load %arg7[%c0_17, %c0_18, %c0_19] : memref<1x16x1xf32, #tpu.memory_space<vmem>>, vector<1x16x1xf32>
    %24 = vector.shape_cast %23 : vector<1x16x1xf32> to vector<16x1xf32>
    %cst_20 = arith.constant dense<0.000000e+00> : vector<16xf32>
    %25 = vector.multi_reduction <add>, %18, %cst_20 [1] : vector<16x256xf32> to vector<16xf32>
    %26 = vector.shape_cast %25 : vector<16xf32> to vector<16x1xf32>
    %27 = arith.addf %24, %26 : vector<16x1xf32>
    %c0_21 = arith.constant 0 : index
    %c0_22 = arith.constant 0 : index
    %c0_23 = arith.constant 0 : index
    %28 = vector.load %arg7[%c0_21, %c0_22, %c0_23] : memref<1x16x1xf32, #tpu.memory_space<vmem>>, vector<1x16x1xf32>
    %29 = vector.shape_cast %28 : vector<1x16x1xf32> to vector<16x1xf32>
    %30 = vector.shape_cast %27 : vector<16x1xf32> to vector<1x16x1xf32>
    tpu.vector_store %arg7[%c0_21, %c0_22, %c0_23], %30 {strides = array<i32>} : memref<1x16x1xf32, #tpu.memory_space<vmem>>, vector<1x16x1xf32>,
    %c0_24 = arith.constant 0 : index
    %c0_25 = arith.constant 0 : index
    %c0_26 = arith.constant 0 : index
    %31 = vector.load %arg8[%c0_24, %c0_25, %c0_26] : memref<1x16x1xf32, #tpu.memory_space<vmem>>, vector<1x16x1xf32>
    %32 = vector.shape_cast %31 : vector<1x16x1xf32> to vector<16x1xf32>
    %33 = arith.mulf %18, %18 : vector<16x256xf32>
    %cst_27 = arith.constant dense<0.000000e+00> : vector<16xf32>
    %34 = vector.multi_reduction <add>, %33, %cst_27 [1] : vector<16x256xf32> to vector<16xf32>
    %35 = vector.shape_cast %34 : vector<16xf32> to vector<16x1xf32>
    %36 = arith.addf %32, %35 : vector<16x1xf32>
    %c0_28 = arith.constant 0 : index
    %c0_29 = arith.constant 0 : index
    %c0_30 = arith.constant 0 : index
    %37 = vector.load %arg8[%c0_28, %c0_29, %c0_30] : memref<1x16x1xf32, #tpu.memory_space<vmem>>, vector<1x16x1xf32>
    %38 = vector.shape_cast %37 : vector<1x16x1xf32> to vector<16x1xf32>
    %39 = vector.shape_cast %36 : vector<16x1xf32> to vector<1x16x1xf32>
    tpu.vector_store %arg8[%c0_28, %c0_29, %c0_30], %39 {strides = array<i32>} : memref<1x16x1xf32, #tpu.memory_space<vmem>>, vector<1x16x1xf32>,
    return
  }
  func.func @transform_0(%arg0: i32, %arg1: i32) -> (i32, i32, i32) {
    %c0_i32 = arith.constant 0 : i32
    %c0_i32_0 = arith.constant 0 : i32
    %c0_i32_1 = arith.constant 0 : i32
    return %arg0, %c0_i32, %c0_i32_0 : i32, i32, i32
  }
  func.func @transform_1(%arg0: i32, %arg1: i32) -> (i32, i32, i32) {
    %c0_i32 = arith.constant 0 : i32
    %c0_i32_0 = arith.constant 0 : i32
    return %arg0, %arg1, %c0_i32 : i32, i32, i32
  }
  func.func @transform_2(%arg0: i32, %arg1: i32) -> (i32, i32) {
    %c0_i32 = arith.constant 0 : i32
    %c0_i32_0 = arith.constant 0 : i32
    %c0_i32_1 = arith.constant 0 : i32
    return %c0_i32, %c0_i32_0 : i32, i32
  }
  func.func @transform_3(%arg0: i32, %arg1: i32) -> (i32, i32) {
    %c0_i32 = arith.constant 0 : i32
    %c0_i32_0 = arith.constant 0 : i32
    %c0_i32_1 = arith.constant 0 : i32
    return %c0_i32, %c0_i32_0 : i32, i32
  }
  func.func @transform_4(%arg0: i32, %arg1: i32) -> (i32, i32, i32) {
    %c0_i32 = arith.constant 0 : i32
    %c0_i32_0 = arith.constant 0 : i32
    return %arg0, %c0_i32, %arg1 : i32, i32, i32
  }
  func.func @transform_5(%arg0: i32, %arg1: i32) -> (i32, i32, i32) {
    %c0_i32 = arith.constant 0 : i32
    %c0_i32_0 = arith.constant 0 : i32
    %c0_i32_1 = arith.constant 0 : i32
    return %arg0, %c0_i32, %c0_i32_0 : i32, i32, i32
  }
  func.func @transform_6(%arg0: i32, %arg1: i32) -> (i32, i32, i32) {
    %c0_i32 = arith.constant 0 : i32
    %c0_i32_0 = arith.constant 0 : i32
    %c0_i32_1 = arith.constant 0 : i32
    return %arg0, %c0_i32, %c0_i32_0 : i32, i32, i32
  }
}

module attributes {stable_mosaic.version = 11 : i64} {
  func.func @bn_residual_kernel(%arg0: i32, %arg1: i32, %arg2: memref<16x1xf32, #tpu.memory_space<vmem>>, %arg3: memref<16x1xf32, #tpu.memory_space<vmem>>, %arg4: memref<1x16x256xbf16, #tpu.memory_space<vmem>>, %arg5: memref<1x16x256xf32, #tpu.memory_space<vmem>>, %arg6: memref<1x16x256xf32, #tpu.memory_space<vmem>>) attributes {dimension_semantics = [#tpu.dimension_semantics<parallel>, #tpu.dimension_semantics<parallel>], iteration_bounds = array<i64: 2, 1>, scalar_prefetch = 0 : i64, scratch_operands = 0 : i64, tpu.core_type = #tpu.core_type<tc>, window_params = [{pipeline_mode = #tpu.pipeline_mode<synchronous>, transform_indices = @transform_0, window_bounds = array<i64: 16, 1>}, {pipeline_mode = #tpu.pipeline_mode<synchronous>, transform_indices = @transform_1, window_bounds = array<i64: 16, 1>}, {transform_indices = @transform_2, window_bounds = array<i64: 1, 16, 256>}, {transform_indices = @transform_3, window_bounds = array<i64: 1, 16, 256>}, {transform_indices = @transform_4, window_bounds = array<i64: 1, 16, 256>}]} {
    %c0 = arith.constant 0 : index
    %c0_0 = arith.constant 0 : index
    %c0_1 = arith.constant 0 : index
    %0 = vector.load %arg4[%c0, %c0_0, %c0_1] : memref<1x16x256xbf16, #tpu.memory_space<vmem>>, vector<1x16x256xbf16>
    %1 = vector.shape_cast %0 : vector<1x16x256xbf16> to vector<16x256xbf16>
    %2 = arith.extf %1 : vector<16x256xbf16> to vector<16x256xf32>
    %c0_2 = arith.constant 0 : index
    %c0_3 = arith.constant 0 : index
    %3 = vector.load %arg2[%c0_2, %c0_3] : memref<16x1xf32, #tpu.memory_space<vmem>>, vector<16x1xf32>
    %4 = vector.broadcast %3 : vector<16x1xf32> to vector<16x256xf32>
    %5 = arith.mulf %2, %4 : vector<16x256xf32>
    %c0_4 = arith.constant 0 : index
    %c0_5 = arith.constant 0 : index
    %6 = vector.load %arg3[%c0_4, %c0_5] : memref<16x1xf32, #tpu.memory_space<vmem>>, vector<16x1xf32>
    %7 = vector.broadcast %6 : vector<16x1xf32> to vector<16x256xf32>
    %8 = arith.addf %5, %7 : vector<16x256xf32>
    %c0_6 = arith.constant 0 : index
    %c0_7 = arith.constant 0 : index
    %c0_8 = arith.constant 0 : index
    %9 = vector.load %arg5[%c0_6, %c0_7, %c0_8] : memref<1x16x256xf32, #tpu.memory_space<vmem>>, vector<1x16x256xf32>
    %10 = vector.shape_cast %9 : vector<1x16x256xf32> to vector<16x256xf32>
    %11 = arith.addf %8, %10 : vector<16x256xf32>
    %c0_9 = arith.constant 0 : index
    %c0_10 = arith.constant 0 : index
    %c0_11 = arith.constant 0 : index
    %12 = vector.load %arg6[%c0_9, %c0_10, %c0_11] : memref<1x16x256xf32, #tpu.memory_space<vmem>>, vector<1x16x256xf32>
    %13 = vector.shape_cast %12 : vector<1x16x256xf32> to vector<16x256xf32>
    %14 = vector.shape_cast %11 : vector<16x256xf32> to vector<1x16x256xf32>
    tpu.vector_store %arg6[%c0_9, %c0_10, %c0_11], %14 {strides = array<i32>} : memref<1x16x256xf32, #tpu.memory_space<vmem>>, vector<1x16x256xf32>,
    return
  }
  func.func @transform_0(%arg0: i32, %arg1: i32) -> (i32, i32) {
    %c0_i32 = arith.constant 0 : i32
    %c0_i32_0 = arith.constant 0 : i32
    %c0_i32_1 = arith.constant 0 : i32
    return %c0_i32, %c0_i32_0 : i32, i32
  }
  func.func @transform_1(%arg0: i32, %arg1: i32) -> (i32, i32) {
    %c0_i32 = arith.constant 0 : i32
    %c0_i32_0 = arith.constant 0 : i32
    %c0_i32_1 = arith.constant 0 : i32
    return %c0_i32, %c0_i32_0 : i32, i32
  }
  func.func @transform_2(%arg0: i32, %arg1: i32) -> (i32, i32, i32) {
    %c0_i32 = arith.constant 0 : i32
    %c0_i32_0 = arith.constant 0 : i32
    return %arg0, %c0_i32, %arg1 : i32, i32, i32
  }
  func.func @transform_3(%arg0: i32, %arg1: i32) -> (i32, i32, i32) {
    %c0_i32 = arith.constant 0 : i32
    %c0_i32_0 = arith.constant 0 : i32
    return %arg0, %c0_i32, %arg1 : i32, i32, i32
  }
  func.func @transform_4(%arg0: i32, %arg1: i32) -> (i32, i32, i32) {
    %c0_i32 = arith.constant 0 : i32
    %c0_i32_0 = arith.constant 0 : i32
    return %arg0, %c0_i32, %arg1 : i32, i32, i32
  }
}

</mosaic_0001>

<llo_original>
// kernel: snl_forward.3
$region0: #{snl_forward.3}
  #allocation0 [shape = 'u32[]', space=smem, size = 0x4, offset = 0x4, fixed_abs, tag = 'smem constant byte address 0x4 - core index']
  #allocation1 [shape = 'u32[72,128]{1,0:T(1,128)}', space=vmem, size = 0x9000, scoped, tag = 'internal scratch']
  %s0 = inlined_call_operand.vmem [shape: f32[16,1], index: 0, kind: input, shape index: {}]
  %s1 = inlined_call_operand.vmem [shape: f32[16,1], index: 1, kind: input, shape index: {}]
  %s2 = inlined_call_operand.vmem [shape: bf16[2,16,256], index: 2, kind: input, shape index: {}]
  %s3 = inlined_call_operand.vmem [shape: f32[2,16,256], index: 3, kind: input, shape index: {}]
  %s4 = inlined_call_operand.vmem [shape: f32[2,16,256], index: 4, kind: output, shape index: {}]
  %s5 = sld [smem:[#allocation0]]
  $region49: #{snl_forward.3} parent=0
    _
  %s7 = ssub.s32 1, %s5
  %s8 = scalar_select 0, %s7, %s5
  loop: start=0, step=1, limit=4
  $region2: #{snl_forward.3} parent=0 // loop_pre_header
    _
  $region3: #{snl_forward.3} parent=0 // loop_header
    %s10 = sphi 0, %s14
    %p11 = scmp.ge.s32.totalorder %s10, 4
    %s17 = sphi 0, %s29
    %s18 = sphi 0, %s25
    %s19 = sphi 0, %s17
    %s20 = sphi 0, %s18
    %s21 = sphi 0, %s19
    %s22 = sphi 0, %s20
    %s30 = sphi 0, %s30
    %s32 = sphi 0, %s30
    %s33 = sphi 0, %s32
    %s47 = sphi 0, %s33
    %s51 = sphi 0, %s51
    %s53 = sphi 0, %s51
    %s54 = sphi 0, %s53
    %s68 = sphi 0, %s54
    %s76 = sphi 0, %s78
    %s79 = sphi 0, %s76
    %s80 = sphi 0, %s79
    %s96 = sphi 0, %s80
    %s104 = sphi 0, %s106
    %s107 = sphi 0, %s104
    %s108 = sphi 0, %s107
    %s124 = sphi 0, %s108
    %s132 = sphi 0, %s134
    %s135 = sphi 0, %s132
    %s136 = sphi 0, %s135
    %s152 = sphi 0, %s136
  $region4: #{snl_forward.3} parent=0 // loop_header_branch
    %13 = sbr.rel (%p11) target = $region8
  $region5: #{snl_forward.3} parent=0 // loop_body
    %s15 = ssub.s32 %s10, 1
    %s16 = ssub.s32 %s10, 2
    %s23 = sadd.s32 1, %s18
    %p24 = scmp.ge.s32.totalorder %s23, 1
    %s25 = scalar_select %p24, 0, %s23
    %s26 = sadd.s32 1, %s17
    %s27 = scalar_select %p24, %s26, %s17
    %p28 = scmp.ge.s32.totalorder %s27, 2
    %s29 = scalar_select %p28, 0, %s27
    %s31 = sadd.s32 %s30, 1
    %p34 = scmp.eq.s32.totalorder %s10, 1
    %p35 = scmp.ne.s32.totalorder %s30, %s32
    %p36 = scmp.eq.s32.totalorder %s10, 0
    %p37 = por %p35, %p36
    %p38 = scmp.ne.s32.totalorder %s30, %s32
    %p39 = scmp.eq.s32.totalorder %s15, 1
    %p40 = por %p38, %p39
    %p41 = scmp.ne.s32.totalorder %s32, %s33
    %p42 = scmp.eq.s32.totalorder %s15, 0
    %p43 = por %p41, %p42
    %p44 = scmp.ne.s32.totalorder %s32, %s33
    %p45 = scmp.eq.s32.totalorder %s16, 1
    %p46 = por %p44, %p45
    %p48 = scmp.ne.s32.totalorder %s33, %s47
    %p49 = scmp.eq.s32.totalorder %s16, 0
    %p50 = por %p48, %p49
    %s52 = sadd.s32 %s51, 1
    %p55 = scmp.eq.s32.totalorder %s10, 1
    %p56 = scmp.ne.s32.totalorder %s51, %s53
    %p57 = scmp.eq.s32.totalorder %s10, 0
    %p58 = por %p56, %p57
    %p59 = scmp.ne.s32.totalorder %s51, %s53
    %p60 = scmp.eq.s32.totalorder %s15, 1
    %p61 = por %p59, %p60
    %p62 = scmp.ne.s32.totalorder %s53, %s54
    %p63 = scmp.eq.s32.totalorder %s15, 0
    %p64 = por %p62, %p63
    %p65 = scmp.ne.s32.totalorder %s53, %s54
    %p66 = scmp.eq.s32.totalorder %s16, 1
    %p67 = por %p65, %p66
    %p69 = scmp.ne.s32.totalorder %s54, %s68
    %p70 = scmp.eq.s32.totalorder %s16, 0
    %p71 = por %p69, %p70
    %s72 = ssub.s32 %s17, %s29
    %s73 = ssub.s32 %s18, %s25
    %s74 = sor.u32 %s72, %s73
    %p75 = scmp.eq.s32.totalorder %s74, 0
    %s77 = sadd.s32 %s76, 1
    %s78 = scalar_select %p75, %s76, %s77
    %p81 = pneg %p75
    %p82 = scmp.eq.s32.totalorder %s10, 1
    %p83 = por %p81, %p82
    %p84 = scmp.ne.s32.totalorder %s76, %s79
    %p85 = scmp.eq.s32.totalorder %s10, 0
    %p86 = por %p84, %p85
    %p87 = scmp.ne.s32.totalorder %s76, %s79
    %p88 = scmp.eq.s32.totalorder %s15, 1
    %p89 = por %p87, %p88
    %p90 = scmp.ne.s32.totalorder %s79, %s80
    %p91 = scmp.eq.s32.totalorder %s15, 0
    %p92 = por %p90, %p91
    %p93 = scmp.ne.s32.totalorder %s79, %s80
    %p94 = scmp.eq.s32.totalorder %s16, 1
    %p95 = por %p93, %p94
    %p97 = scmp.ne.s32.totalorder %s80, %s96
    %p98 = scmp.eq.s32.totalorder %s16, 0
    %p99 = por %p97, %p98
    %s100 = ssub.s32 %s17, %s29
    %s101 = ssub.s32 %s18, %s25
    %s102 = sor.u32 %s100, %s101
    %p103 = scmp.eq.s32.totalorder %s102, 0
    %s105 = sadd.s32 %s104, 1
    %s106 = scalar_select %p103, %s104, %s105
    %p109 = pneg %p103
    %p110 = scmp.eq.s32.totalorder %s10, 1
    %p111 = por %p109, %p110
    %p112 = scmp.ne.s32.totalorder %s104, %s107
    %p113 = scmp.eq.s32.totalorder %s10, 0
    %p114 = por %p112, %p113
    %p115 = scmp.ne.s32.totalorder %s104, %s107
    %p116 = scmp.eq.s32.totalorder %s15, 1
    %p117 = por %p115, %p116
    %p118 = scmp.ne.s32.totalorder %s107, %s108
    %p119 = scmp.eq.s32.totalorder %s15, 0
    %p120 = por %p118, %p119
    %p121 = scmp.ne.s32.totalorder %s107, %s108
    %p122 = scmp.eq.s32.totalorder %s16, 1
    %p123 = por %p121, %p122
    %p125 = scmp.ne.s32.totalorder %s108, %s124
    %p126 = scmp.eq.s32.totalorder %s16, 0
    %p127 = por %p125, %p126
    %s128 = ssub.s32 %s17, %s29
    %s129 = ssub.s32 %s18, %s25
    %s130 = sor.u32 %s128, %s129
    %p131 = scmp.eq.s32.totalorder %s130, 0
    %s133 = sadd.s32 %s132, 1
    %s134 = scalar_select %p131, %s132, %s133
    %p137 = pneg %p131
    %p138 = scmp.eq.s32.totalorder %s10, 1
    %p139 = por %p137, %p138
    %p140 = scmp.ne.s32.totalorder %s132, %s135
    %p141 = scmp.eq.s32.totalorder %s10, 0
    %p142 = por %p140, %p141
    %p143 = scmp.ne.s32.totalorder %s132, %s135
    %p144 = scmp.eq.s32.totalorder %s15, 1
    %p145 = por %p143, %p144
    %p146 = scmp.ne.s32.totalorder %s135, %s136
    %p147 = scmp.eq.s32.totalorder %s15, 0
    %p148 = por %p146, %p147
    %p149 = scmp.ne.s32.totalorder %s135, %s136
    %p150 = scmp.eq.s32.totalorder %s16, 1
    %p151 = por %p149, %p150
    %p153 = scmp.ne.s32.totalorder %s136, %s152
    %p154 = scmp.eq.s32.totalorder %s16, 0
    %p155 = por %p153, %p154
    %p156 = scmp.le.s32.totalorder 1, %s10
    %p157 = scmp.lt.s32.totalorder %s10, 3
    %p158 = pnand %p156, %p157
    %p159 = pneg %p158
    // Predicated region
    $region9: #{snl_forward.3} parent=5 // pred_check
      _
    $region10: #{snl_forward.3} parent=5 // pred_check_branch
      %161 = sbr.rel (%p158) target = $region12
    $region11: #{snl_forward.3} parent=5 // pred_region
      %s162 = ssub.s32 %s10, 1
      // Predicated region
      $region13: #{snl_forward.3} parent=11 // pred_check
        %p163 = pneg %p43
      $region14: #{snl_forward.3} parent=11 // pred_check_branch
        %165 = sbr.rel (%p163) target = $region16
      $region15: #{snl_forward.3} parent=11 // pred_region
        _
      $region16: #{snl_forward.3} parent=11 // pred_fallthru
        _
      // Predicated region
      $region17: #{snl_forward.3} parent=11 // pred_check
        %p166 = pneg %p64
      $region18: #{snl_forward.3} parent=11 // pred_check_branch
        %168 = sbr.rel (%p166) target = $region20
      $region19: #{snl_forward.3} parent=11 // pred_region
        _
      $region20: #{snl_forward.3} parent=11 // pred_fallthru
        _
    $region12: #{snl_forward.3} parent=5 // pred_fallthru
      _
    %p169 = scmp.lt.s32.totalorder %s10, 2
    // Predicated region
    $region21: #{snl_forward.3} parent=5 // pred_check
      %p170 = pneg %p169
    $region22: #{snl_forward.3} parent=5 // pred_check_branch
      %172 = sbr.rel (%p170) target = $region24
    $region23: #{snl_forward.3} parent=5 // pred_region
      // Predicated region
      $region25: #{snl_forward.3} parent=23 // pred_check
        %p173 = pneg %p86
      $region26: #{snl_forward.3} parent=23 // pred_check_branch
        %175 = sbr.rel (%p173) target = $region28
      $region27: #{snl_forward.3} parent=23 // pred_region
        %s176 = smul.u32 2, %s18
        %p177 = scmp.lt.s32.totalorder %s17, 1
        %s178 = scalar_select %p177, %s17, 1
        %p179 = scmp.lt.s32.totalorder %s176, 1
        %s180 = scalar_select %p179, %s176, 1
        %s181 = smul.addr %s178, 4
        %s182 = sadd.s32 %s180, %s181
        %s183 = smul.addr %s182, 4
        %s184 = scalar_lea.vmem %s2, %s183
        %s185 = smul.u32 2, %s18
      $region28: #{snl_forward.3} parent=23 // pred_fallthru
        _
      // Predicated region
      $region29: #{snl_forward.3} parent=23 // pred_check
        %p186 = pneg %p114
      $region30: #{snl_forward.3} parent=23 // pred_check_branch
        %188 = sbr.rel (%p186) target = $region32
      $region31: #{snl_forward.3} parent=23 // pred_region
        %s189 = smul.u32 2, %s18
        %p190 = scmp.lt.s32.totalorder %s17, 1
        %s191 = scalar_select %p190, %s17, 1
        %p192 = scmp.lt.s32.totalorder %s189, 1
        %s193 = scalar_select %p192, %s189, 1
        %s194 = smul.addr %s191, 4
        %s195 = sadd.s32 %s193, %s194
        %s196 = smul.addr %s195, 8
        %s197 = scalar_lea.vmem %s3, %s196
        %s198 = smul.u32 2, %s18
      $region32: #{snl_forward.3} parent=23 // pred_fallthru
        _
    $region24: #{snl_forward.3} parent=5 // pred_fallthru
      _
    %p199 = scmp.le.s32.totalorder 1, %s10
    %p200 = scmp.lt.s32.totalorder %s10, 3
    %p201 = pnand %p199, %p200
    %p202 = pneg %p201
    // Predicated region
    $region33: #{snl_forward.3} parent=5 // pred_check
      _
    $region34: #{snl_forward.3} parent=5 // pred_check_branch
      %204 = sbr.rel (%p201) target = $region36
    $region35: #{snl_forward.3} parent=5 // pred_region
      %s205 = ssub.s32 %s10, 1
      %p206 = pneg %p43
      %p207 = pneg %p40
      %p208 = pneg %p64
      %p209 = pneg %p61
      %s210 = smul.u32 2, %s20
      %p211 = scmp.lt.s32.totalorder %s19, 1
      %s212 = scalar_select %p211, %s19, 1
      %p213 = scmp.lt.s32.totalorder %s210, 1
      %s214 = scalar_select %p213, %s210, 1
      %s215 = smul.addr %s212, 4
      %s216 = sadd.s32 %s214, %s215
      %s217 = smul.addr %s216, 4
      %s218 = scalar_lea.vmem %s2, %s217
      %p219 = pneg %p92
      %p220 = pneg %p89
      %s221 = smul.u32 2, %s20
      %p222 = scmp.lt.s32.totalorder %s19, 1
      %s223 = scalar_select %p222, %s19, 1
      %p224 = scmp.lt.s32.totalorder %s221, 1
      %s225 = scalar_select %p224, %s221, 1
      %s226 = smul.addr %s223, 4
      %s227 = sadd.s32 %s225, %s226
      %s228 = smul.addr %s227, 8
      %s229 = scalar_lea.vmem %s3, %s228
      %p230 = pneg %p120
      %p231 = pneg %p117
      %p232 = pneg %p148
      %p233 = pneg %p145
      %s234 = smul.u32 2, %s20
      %p235 = scmp.lt.s32.totalorder %s19, 1
      %s236 = scalar_select %p235, %s19, 1
      %p237 = scmp.lt.s32.totalorder %s234, 1
      %s238 = scalar_select %p237, %s234, 1
      %s239 = smul.addr %s236, 4
      %s240 = sadd.s32 %s238, %s239
      %s241 = smul.addr %s240, 8
      %s242 = scalar_lea.vmem %s4, %s241
      %s243 = smul.u32 2, %s20
      %p244 = scmp.lt.s32.totalorder %s19, 1
      %s245 = scalar_select %p244, %s19, 1
      %p246 = scmp.lt.s32.totalorder %s243, 1
      %s247 = scalar_select %p246, %s243, 1
      %s248 = smul.addr %s245, 4
      %s249 = sadd.s32 %s247, %s248
      %s250 = smul.addr %s249, 4
      %s251 = scalar_lea.vmem %s2, %s250
      %s252 = smul.u32 2, %s20
      %s253 = smul.u32 2, %s20
      %p254 = scmp.lt.s32.totalorder %s19, 1
      %s255 = scalar_select %p254, %s19, 1
      %p256 = scmp.lt.s32.totalorder %s253, 1
      %s257 = scalar_select %p256, %s253, 1
      %s258 = smul.addr %s255, 4
      %s259 = sadd.s32 %s257, %s258
      %s260 = smul.addr %s259, 8
      %s261 = scalar_lea.vmem %s3, %s260
      %s262 = smul.u32 2, %s20
      %s263 = smul.u32 2, %s20
      %p264 = scmp.lt.s32.totalorder %s19, 1
      %s265 = scalar_select %p264, %s19, 1
      %p266 = scmp.lt.s32.totalorder %s263, 1
      %s267 = scalar_select %p266, %s263, 1
      %s268 = smul.addr %s265, 4
      %s269 = sadd.s32 %s267, %s268
      %s270 = smul.addr %s269, 8
      %s271 = scalar_lea.vmem %s4, %s270
      %s272 = smul.u32 2, %s20
      %v273 = vld [vmem:[%s251] sm:$0xff]
      %v274 = vld [vmem:[%s251 + $0x8] sm:$0xff]
      %v275 = vunpack.c.l.bf16 %v273
      %v276 = vunpack.c.h.bf16 %v273
      %v277 = vunpack.c.l.bf16 %v274
      %v278 = vunpack.c.h.bf16 %v274
      %v279 = vld [vmem:[%s0] sm:$0xff]
      %v280 = vld [vmem:[%s0 + $0x8] sm:$0xff]
      %282 = vset.pattern.permute.xlu0 0
      %283 = vperm.xlu0 %282, %v279
      %v284 = vpop.permute.xlu0 %283
      %287 = vset.pattern.permute.xlu0 0
      %288 = vperm.xlu0 %287, %v280
      %v289 = vpop.permute.xlu0 %288
      %v291 = vmul.f32 %v275, %v284
      %v292 = vmul.f32 %v276, %v284
      %v293 = vmul.f32 %v277, %v289
      %v294 = vmul.f32 %v278, %v289
      %v295 = vld [vmem:[%s1] sm:$0xff]
      %v296 = vld [vmem:[%s1 + $0x8] sm:$0xff]
      %298 = vset.pattern.permute.xlu0 0
      %299 = vperm.xlu0 %298, %v295
      %v300 = vpop.permute.xlu0 %299
      %303 = vset.pattern.permute.xlu0 0
      %304 = vperm.xlu0 %303, %v296
      %v305 = vpop.permute.xlu0 %304
      %v307 = vadd.f32 %v291, %v300
      %v308 = vadd.f32 %v292, %v300
      %v309 = vadd.f32 %v293, %v305
      %v310 = vadd.f32 %v294, %v305
      %v311 = vld [vmem:[%s261] sm:$0xff]
      %v312 = vld [vmem:[%s261 + $0x8] sm:$0xff]
      %v313 = vld [vmem:[%s261 + $0x10] sm:$0xff]
      %v314 = vld [vmem:[%s261 + $0x18] sm:$0xff]
      %v315 = vadd.f32 %v307, %v311
      %v316 = vadd.f32 %v308, %v312
      %v317 = vadd.f32 %v309, %v313
      %v318 = vadd.f32 %v310, %v314
      %319 = vst [vmem:[%s271] sm:$0xff] %v315
      %320 = vst [vmem:[%s271 + $0x8] sm:$0xff] %v316
      %321 = vst [vmem:[%s271 + $0x10] sm:$0xff] %v317
      %322 = vst [vmem:[%s271 + $0x18] sm:$0xff] %v318
      %s323 = smul.u32 2, %s20
      %p324 = scmp.lt.s32.totalorder %s19, 1
      %s325 = scalar_select %p324, %s19, 1
      %p326 = scmp.lt.s32.totalorder %s323, 1
      %s327 = scalar_select %p326, %s323, 1
      %s328 = smul.addr %s325, 4
      %s329 = sadd.s32 %s327, %s328
      %s330 = smul.addr %s329, 8
      %s331 = scalar_lea.vmem %s4, %s330
      // Predicated region
      $region37: #{snl_forward.3} parent=35 // pred_check
        %p332 = pneg %p145
      $region38: #{snl_forward.3} parent=35 // pred_check_branch
        %334 = sbr.rel (%p332) target = $region40
      $region39: #{snl_forward.3} parent=35 // pred_region
        %s335 = smul.u32 2, %s20
      $region40: #{snl_forward.3} parent=35 // pred_fallthru
        _
    $region36: #{snl_forward.3} parent=5 // pred_fallthru
      _
    %p336 = scmp.le.s32.totalorder 2, %s10
    // Predicated region
    $region41: #{snl_forward.3} parent=5 // pred_check
      %p337 = pneg %p336
    $region42: #{snl_forward.3} parent=5 // pred_check_branch
      %339 = sbr.rel (%p337) target = $region44
    $region43: #{snl_forward.3} parent=5 // pred_region
      %s340 = ssub.s32 %s10, 2
      // Predicated region
      $region45: #{snl_forward.3} parent=43 // pred_check
        %p341 = pneg %p151
      $region46: #{snl_forward.3} parent=43 // pred_check_branch
        %343 = sbr.rel (%p341) target = $region48
      $region47: #{snl_forward.3} parent=43 // pred_region
        %s344 = smul.u32 2, %s22
        %p345 = scmp.lt.s32.totalorder %s21, 1
        %s346 = scalar_select %p345, %s21, 1
        %p347 = scmp.lt.s32.totalorder %s344, 1
        %s348 = scalar_select %p347, %s344, 1
        %s349 = smul.addr %s346, 4
        %s350 = sadd.s32 %s348, %s349
        %s351 = smul.addr %s350, 8
        %s352 = scalar_lea.vmem %s4, %s351
      $region48: #{snl_forward.3} parent=43 // pred_fallthru
        _
    $region44: #{snl_forward.3} parent=5 // pred_fallthru
      _
  $region6: #{snl_forward.3} parent=0 // loop_footer
    %s14 = sadd.s32 1, %s10
  $region7: #{snl_forward.3} parent=0 // loop_footer_branch
    %9 = sbr.rel target = $region3
  $region8: #{snl_forward.3} parent=0 // loop_exit
    _

// kernel: snl_forward.2
$region0: #{snl_forward.2}
  #allocation0 [shape = 'u32[]', space=smem, size = 0x4, offset = 0x4, fixed_abs, tag = 'smem constant byte address 0x4 - core index']
  #allocation1 [shape = 'u32[72,128]{1,0:T(1,128)}', space=vmem, size = 0x9000, scoped, tag = 'internal scratch']
  %s0 = inlined_call_operand.vmem [shape: bf16[2,8,256], index: 0, kind: input, shape index: {}]
  %s1 = inlined_call_operand.vmem [shape: bf16[2,256,256], index: 1, kind: input, shape index: {}]
  %s2 = inlined_call_operand.vmem [shape: bf16[16,8], index: 2, kind: input, shape index: {}]
  %s3 = inlined_call_operand.vmem [shape: bf16[16,8], index: 3, kind: input, shape index: {}]
  %s4 = inlined_call_operand.vmem [shape: bf16[2,16,256], index: 4, kind: output, shape index: {0}]
  %s5 = inlined_call_operand.vmem [shape: f32[2,16,1], index: 5, kind: output, shape index: {1}]
  %s6 = inlined_call_operand.vmem [shape: f32[2,16,1], index: 6, kind: output, shape index: {2}]
  %7 = xla_tuple %s4, %s5, %s6
  %s8 = sld [smem:[#allocation0]]
  $region69: #{snl_forward.2} parent=0
    _
  %s10 = ssub.s32 1, %s8
  %s11 = scalar_select 0, %s10, %s8
  loop: start=0, step=1, limit=4
  $region2: #{snl_forward.2} parent=0 // loop_pre_header
    _
  $region3: #{snl_forward.2} parent=0 // loop_header
    %s13 = sphi 0, %s17
    %p14 = scmp.ge.s32.totalorder %s13, 4
    %s20 = sphi 0, %s32
    %s21 = sphi 0, %s28
    %s22 = sphi 0, %s20
    %s23 = sphi 0, %s21
    %s24 = sphi 0, %s22
    %s25 = sphi 0, %s23
    %s35 = sphi 0, %s37
    %s38 = sphi 0, %s35
    %s39 = sphi 0, %s38
    %s55 = sphi 0, %s39
    %s63 = sphi 0, %s65
    %s66 = sphi 0, %s63
    %s67 = sphi 0, %s66
    %s83 = sphi 0, %s67
    %s87 = sphi 0, %s87
    %s89 = sphi 0, %s87
    %s90 = sphi 0, %s89
    %s104 = sphi 0, %s90
    %s108 = sphi 0, %s108
    %s110 = sphi 0, %s108
    %s111 = sphi 0, %s110
    %s125 = sphi 0, %s111
    %s133 = sphi 0, %s135
    %s136 = sphi 0, %s133
    %s137 = sphi 0, %s136
    %s153 = sphi 0, %s137
    %s159 = sphi 0, %s161
    %s162 = sphi 0, %s159
    %s163 = sphi 0, %s162
    %s179 = sphi 0, %s163
    %s185 = sphi 0, %s187
    %s188 = sphi 0, %s185
    %s189 = sphi 0, %s188
    %s205 = sphi 0, %s189
  $region4: #{snl_forward.2} parent=0 // loop_header_branch
    %16 = sbr.rel (%p14) target = $region8
  $region5: #{snl_forward.2} parent=0 // loop_body
    %s18 = ssub.s32 %s13, 1
    %s19 = ssub.s32 %s13, 2
    %s26 = sadd.s32 1, %s21
    %p27 = scmp.ge.s32.totalorder %s26, 1
    %s28 = scalar_select %p27, 0, %s26
    %s29 = sadd.s32 1, %s20
    %s30 = scalar_select %p27, %s29, %s20
    %p31 = scmp.ge.s32.totalorder %s30, 2
    %s32 = scalar_select %p31, 0, %s30
    %s33 = ssub.s32 %s20, %s32
    %p34 = scmp.eq.s32.totalorder %s33, 0
    %s36 = sadd.s32 %s35, 1
    %s37 = scalar_select %p34, %s35, %s36
    %p40 = pneg %p34
    %p41 = scmp.eq.s32.totalorder %s13, 1
    %p42 = por %p40, %p41
    %p43 = scmp.ne.s32.totalorder %s35, %s38
    %p44 = scmp.eq.s32.totalorder %s13, 0
    %p45 = por %p43, %p44
    %p46 = scmp.ne.s32.totalorder %s35, %s38
    %p47 = scmp.eq.s32.totalorder %s18, 1
    %p48 = por %p46, %p47
    %p49 = scmp.ne.s32.totalorder %s38, %s39
    %p50 = scmp.eq.s32.totalorder %s18, 0
    %p51 = por %p49, %p50
    %p52 = scmp.ne.s32.totalorder %s38, %s39
    %p53 = scmp.eq.s32.totalorder %s19, 1
    %p54 = por %p52, %p53
    %p56 = scmp.ne.s32.totalorder %s39, %s55
    %p57 = scmp.eq.s32.totalorder %s19, 0
    %p58 = por %p56, %p57
    %s59 = ssub.s32 %s20, %s32
    %s60 = ssub.s32 %s21, %s28
    %s61 = sor.u32 %s59, %s60
    %p62 = scmp.eq.s32.totalorder %s61, 0
    %s64 = sadd.s32 %s63, 1
    %s65 = scalar_select %p62, %s63, %s64
    %p68 = pneg %p62
    %p69 = scmp.eq.s32.totalorder %s13, 1
    %p70 = por %p68, %p69
    %p71 = scmp.ne.s32.totalorder %s63, %s66
    %p72 = scmp.eq.s32.totalorder %s13, 0
    %p73 = por %p71, %p72
    %p74 = scmp.ne.s32.totalorder %s63, %s66
    %p75 = scmp.eq.s32.totalorder %s18, 1
    %p76 = por %p74, %p75
    %p77 = scmp.ne.s32.totalorder %s66, %s67
    %p78 = scmp.eq.s32.totalorder %s18, 0
    %p79 = por %p77, %p78
    %p80 = scmp.ne.s32.totalorder %s66, %s67
    %p81 = scmp.eq.s32.totalorder %s19, 1
    %p82 = por %p80, %p81
    %p84 = scmp.ne.s32.totalorder %s67, %s83
    %p85 = scmp.eq.s32.totalorder %s19, 0
    %p86 = por %p84, %p85
    %s88 = sadd.s32 %s87, 1
    %p91 = scmp.eq.s32.totalorder %s13, 1
    %p92 = scmp.ne.s32.totalorder %s87, %s89
    %p93 = scmp.eq.s32.totalorder %s13, 0
    %p94 = por %p92, %p93
    %p95 = scmp.ne.s32.totalorder %s87, %s89
    %p96 = scmp.eq.s32.totalorder %s18, 1
    %p97 = por %p95, %p96
    %p98 = scmp.ne.s32.totalorder %s89, %s90
    %p99 = scmp.eq.s32.totalorder %s18, 0
    %p100 = por %p98, %p99
    %p101 = scmp.ne.s32.totalorder %s89, %s90
    %p102 = scmp.eq.s32.totalorder %s19, 1
    %p103 = por %p101, %p102
    %p105 = scmp.ne.s32.totalorder %s90, %s104
    %p106 = scmp.eq.s32.totalorder %s19, 0
    %p107 = por %p105, %p106
    %s109 = sadd.s32 %s108, 1
    %p112 = scmp.eq.s32.totalorder %s13, 1
    %p113 = scmp.ne.s32.totalorder %s108, %s110
    %p114 = scmp.eq.s32.totalorder %s13, 0
    %p115 = por %p113, %p114
    %p116 = scmp.ne.s32.totalorder %s108, %s110
    %p117 = scmp.eq.s32.totalorder %s18, 1
    %p118 = por %p116, %p117
    %p119 = scmp.ne.s32.totalorder %s110, %s111
    %p120 = scmp.eq.s32.totalorder %s18, 0
    %p121 = por %p119, %p120
    %p122 = scmp.ne.s32.totalorder %s110, %s111
    %p123 = scmp.eq.s32.totalorder %s19, 1
    %p124 = por %p122, %p123
    %p126 = scmp.ne.s32.totalorder %s111, %s125
    %p127 = scmp.eq.s32.totalorder %s19, 0
    %p128 = por %p126, %p127
    %s129 = ssub.s32 %s20, %s32
    %s130 = ssub.s32 %s21, %s28
    %s131 = sor.u32 %s129, %s130
    %p132 = scmp.eq.s32.totalorder %s131, 0
    %s134 = sadd.s32 %s133, 1
    %s135 = scalar_select %p132, %s133, %s134
    %p138 = pneg %p132
    %p139 = scmp.eq.s32.totalorder %s13, 1
    %p140 = por %p138, %p139
    %p141 = scmp.ne.s32.totalorder %s133, %s136
    %p142 = scmp.eq.s32.totalorder %s13, 0
    %p143 = por %p141, %p142
    %p144 = scmp.ne.s32.totalorder %s133, %s136
    %p145 = scmp.eq.s32.totalorder %s18, 1
    %p146 = por %p144, %p145
    %p147 = scmp.ne.s32.totalorder %s136, %s137
    %p148 = scmp.eq.s32.totalorder %s18, 0
    %p149 = por %p147, %p148
    %p150 = scmp.ne.s32.totalorder %s136, %s137
    %p151 = scmp.eq.s32.totalorder %s19, 1
    %p152 = por %p150, %p151
    %p154 = scmp.ne.s32.totalorder %s137, %s153
    %p155 = scmp.eq.s32.totalorder %s19, 0
    %p156 = por %p154, %p155
    %s157 = ssub.s32 %s20, %s32
    %p158 = scmp.eq.s32.totalorder %s157, 0
    %s160 = sadd.s32 %s159, 1
    %s161 = scalar_select %p158, %s159, %s160
    %p164 = pneg %p158
    %p165 = scmp.eq.s32.totalorder %s13, 1
    %p166 = por %p164, %p165
    %p167 = scmp.ne.s32.totalorder %s159, %s162
    %p168 = scmp.eq.s32.totalorder %s13, 0
    %p169 = por %p167, %p168
    %p170 = scmp.ne.s32.totalorder %s159, %s162
    %p171 = scmp.eq.s32.totalorder %s18, 1
    %p172 = por %p170, %p171
    %p173 = scmp.ne.s32.totalorder %s162, %s163
    %p174 = scmp.eq.s32.totalorder %s18, 0
    %p175 = por %p173, %p174
    %p176 = scmp.ne.s32.totalorder %s162, %s163
    %p177 = scmp.eq.s32.totalorder %s19, 1
    %p178 = por %p176, %p177
    %p180 = scmp.ne.s32.totalorder %s163, %s179
    %p181 = scmp.eq.s32.totalorder %s19, 0
    %p182 = por %p180, %p181
    %s183 = ssub.s32 %s20, %s32
    %p184 = scmp.eq.s32.totalorder %s183, 0
    %s186 = sadd.s32 %s185, 1
    %s187 = scalar_select %p184, %s185, %s186
    %p190 = pneg %p184
    %p191 = scmp.eq.s32.totalorder %s13, 1
    %p192 = por %p190, %p191
    %p193 = scmp.ne.s32.totalorder %s185, %s188
    %p194 = scmp.eq.s32.totalorder %s13, 0
    %p195 = por %p193, %p194
    %p196 = scmp.ne.s32.totalorder %s185, %s188
    %p197 = scmp.eq.s32.totalorder %s18, 1
    %p198 = por %p196, %p197
    %p199 = scmp.ne.s32.totalorder %s188, %s189
    %p200 = scmp.eq.s32.totalorder %s18, 0
    %p201 = por %p199, %p200
    %p202 = scmp.ne.s32.totalorder %s188, %s189
    %p203 = scmp.eq.s32.totalorder %s19, 1
    %p204 = por %p202, %p203
    %p206 = scmp.ne.s32.totalorder %s189, %s205
    %p207 = scmp.eq.s32.totalorder %s19, 0
    %p208 = por %p206, %p207
    %p209 = scmp.le.s32.totalorder 1, %s13
    %p210 = scmp.lt.s32.totalorder %s13, 3
    %p211 = pnand %p209, %p210
    %p212 = pneg %p211
    // Predicated region
    $region9: #{snl_forward.2} parent=5 // pred_check
      _
    $region10: #{snl_forward.2} parent=5 // pred_check_branch
      %214 = sbr.rel (%p211) target = $region12
    $region11: #{snl_forward.2} parent=5 // pred_region
      %s215 = ssub.s32 %s13, 1
      // Predicated region
      $region13: #{snl_forward.2} parent=11 // pred_check
        %p216 = pneg %p100
      $region14: #{snl_forward.2} parent=11 // pred_check_branch
        %218 = sbr.rel (%p216) target = $region16
      $region15: #{snl_forward.2} parent=11 // pred_region
        _
      $region16: #{snl_forward.2} parent=11 // pred_fallthru
        _
      // Predicated region
      $region17: #{snl_forward.2} parent=11 // pred_check
        %p219 = pneg %p121
      $region18: #{snl_forward.2} parent=11 // pred_check_branch
        %221 = sbr.rel (%p219) target = $region20
      $region19: #{snl_forward.2} parent=11 // pred_region
        _
      $region20: #{snl_forward.2} parent=11 // pred_fallthru
        _
    $region12: #{snl_forward.2} parent=5 // pred_fallthru
      _
    %p222 = scmp.lt.s32.totalorder %s13, 2
    // Predicated region
    $region21: #{snl_forward.2} parent=5 // pred_check
      %p223 = pneg %p222
    $region22: #{snl_forward.2} parent=5 // pred_check_branch
      %225 = sbr.rel (%p223) target = $region24
    $region23: #{snl_forward.2} parent=5 // pred_region
      // Predicated region
      $region25: #{snl_forward.2} parent=23 // pred_check
        %p226 = pneg %p45
      $region26: #{snl_forward.2} parent=23 // pred_check_branch
        %228 = sbr.rel (%p226) target = $region28
      $region27: #{snl_forward.2} parent=23 // pred_region
        %p229 = scmp.lt.s32.totalorder %s20, 1
        %s230 = scalar_select %p229, %s20, 1
        %s231 = smul.addr %s230, 2
        %s232 = smul.addr %s231, 4
        %s233 = scalar_lea.vmem %s0, %s232
      $region28: #{snl_forward.2} parent=23 // pred_fallthru
        _
      // Predicated region
      $region29: #{snl_forward.2} parent=23 // pred_check
        %p234 = pneg %p73
      $region30: #{snl_forward.2} parent=23 // pred_check_branch
        %236 = sbr.rel (%p234) target = $region32
      $region31: #{snl_forward.2} parent=23 // pred_region
        %s237 = smul.u32 32, %s21
        %p238 = scmp.lt.s32.totalorder %s20, 1
        %s239 = scalar_select %p238, %s20, 1
        %p240 = scmp.lt.s32.totalorder %s237, 31
        %s241 = scalar_select %p240, %s237, 31
        %s242 = smul.addr %s241, 2
        %s243 = smul.addr %s239, 64
        %s244 = sadd.s32 %s242, %s243
        %s245 = smul.addr %s244, 4
        %s246 = scalar_lea.vmem %s1, %s245
        %s247 = smul.u32 32, %s21
      $region32: #{snl_forward.2} parent=23 // pred_fallthru
        _
    $region24: #{snl_forward.2} parent=5 // pred_fallthru
      _
    %p248 = scmp.le.s32.totalorder 1, %s13
    %p249 = scmp.lt.s32.totalorder %s13, 3
    %p250 = pnand %p248, %p249
    %p251 = pneg %p250
    // Predicated region
    $region33: #{snl_forward.2} parent=5 // pred_check
      _
    $region34: #{snl_forward.2} parent=5 // pred_check_branch
      %253 = sbr.rel (%p250) target = $region36
    $region35: #{snl_forward.2} parent=5 // pred_region
      %s254 = ssub.s32 %s13, 1
      %p255 = scmp.lt.s32.totalorder %s22, 1
      %s256 = scalar_select %p255, %s22, 1
      %s257 = smul.addr %s256, 2
      %s258 = smul.addr %s257, 4
      %s259 = scalar_lea.vmem %s0, %s258
      %p260 = pneg %p51
      %p261 = pneg %p48
      %s262 = smul.u32 32, %s23
      %p263 = scmp.lt.s32.totalorder %s22, 1
      %s264 = scalar_select %p263, %s22, 1
      %p265 = scmp.lt.s32.totalorder %s262, 31
      %s266 = scalar_select %p265, %s262, 31
      %s267 = smul.addr %s266, 2
      %s268 = smul.addr %s264, 64
      %s269 = sadd.s32 %s267, %s268
      %s270 = smul.addr %s269, 4
      %s271 = scalar_lea.vmem %s1, %s270
      %p272 = pneg %p79
      %p273 = pneg %p76
      %p274 = pneg %p100
      %p275 = pneg %p97
      %p276 = pneg %p121
      %p277 = pneg %p118
      %p278 = pneg %p149
      %p279 = pneg %p146
      %s280 = smul.u32 2, %s23
      %p281 = scmp.lt.s32.totalorder %s22, 1
      %s282 = scalar_select %p281, %s22, 1
      %p283 = scmp.lt.s32.totalorder %s280, 1
      %s284 = scalar_select %p283, %s280, 1
      %s285 = smul.addr %s282, 4
      %s286 = sadd.s32 %s284, %s285
      %s287 = smul.addr %s286, 4
      %s288 = scalar_lea.vmem %s4, %s287
      %p289 = pneg %p175
      %p290 = pneg %p172
      %p291 = scmp.lt.s32.totalorder %s22, 1
      %s292 = scalar_select %p291, %s22, 1
      %s293 = smul.addr %s292, 2
      %s294 = smul.addr %s293, 8
      %s295 = scalar_lea.vmem %s5, %s294
      %p296 = pneg %p201
      %p297 = pneg %p198
      %p298 = scmp.lt.s32.totalorder %s22, 1
      %s299 = scalar_select %p298, %s22, 1
      %s300 = smul.addr %s299, 2
      %s301 = smul.addr %s300, 8
      %s302 = scalar_lea.vmem %s6, %s301
      %p303 = scmp.lt.s32.totalorder %s22, 1
      %s304 = scalar_select %p303, %s22, 1
      %s305 = smul.addr %s304, 2
      %s306 = smul.addr %s305, 4
      %s307 = scalar_lea.vmem %s0, %s306
      %s308 = smul.u32 32, %s23
      %p309 = scmp.lt.s32.totalorder %s22, 1
      %s310 = scalar_select %p309, %s22, 1
      %p311 = scmp.lt.s32.totalorder %s308, 31
      %s312 = scalar_select %p311, %s308, 31
      %s313 = smul.addr %s312, 2
      %s314 = smul.addr %s310, 64
      %s315 = sadd.s32 %s313, %s314
      %s316 = smul.addr %s315, 4
      %s317 = scalar_lea.vmem %s1, %s316
      %s318 = smul.u32 32, %s23
      %s319 = smul.u32 2, %s23
      %p320 = scmp.lt.s32.totalorder %s22, 1
      %s321 = scalar_select %p320, %s22, 1
      %p322 = scmp.lt.s32.totalorder %s319, 1
      %s323 = scalar_select %p322, %s319, 1
      %s324 = smul.addr %s321, 4
      %s325 = sadd.s32 %s323, %s324
      %s326 = smul.addr %s325, 4
      %s327 = scalar_lea.vmem %s4, %s326
      %s328 = smul.u32 2, %s23
      %p329 = scmp.lt.s32.totalorder %s22, 1
      %s330 = scalar_select %p329, %s22, 1
      %s331 = smul.addr %s330, 2
      %s332 = smul.addr %s331, 8
      %s333 = scalar_lea.vmem %s5, %s332
      %p334 = scmp.lt.s32.totalorder %s22, 1
      %s335 = scalar_select %p334, %s22, 1
      %s336 = smul.addr %s335, 2
      %s337 = smul.addr %s336, 8
      %s338 = scalar_lea.vmem %s6, %s337
      %p340 = scmp.eq.s32.totalorder %s23, 0
      // Predicated region
      $region37: #{snl_forward.2} parent=35 // pred_check
        %p341 = pneg %p340
      $region38: #{snl_forward.2} parent=35 // pred_check_branch
        %343 = sbr.rel (%p341) target = $region40
      $region39: #{snl_forward.2} parent=35 // pred_region
        %vm344 = vcmask 7168
        %345 = vst.msk [vmem:[%s333] sm:$0xff] %vm344, 0.0
        %346 = vst.msk [vmem:[%s333 + $0x8] sm:$0xff] %vm344, 0.0
        %347 = vst.msk [vmem:[%s338] sm:$0xff] %vm344, 0.0
        %348 = vst.msk [vmem:[%s338 + $0x8] sm:$0xff] %vm344, 0.0
      $region40: #{snl_forward.2} parent=35 // pred_fallthru
        _
      %s349 = smul.u32 %s23, 256
      %s350 = sshra.s32 %s349, 7
      %s351 = sand.u32 %s349, 127
      %s352 = smul.addr %s350, 4
      %s353 = scalar_lea.vmem %s307, %s352
      %v354 = vld [vmem:[%s353] sm:$0xff]
      %v355 = vld [vmem:[%s2] sm:$0xf]
      %v356 = vld [vmem:[%s2 + $0x4] sm:$0xf]
      %v359 = vunpack.c.l.b16 %v355
      %v360 = vunpack.c.l.b16 %v356
      %v361 = vpack.c.b16 %v360, %v359
      %v363 = vunpack.c.l.b16 %v354
      %v364 = vunpack.c.h.b16 %v354
      %v365 = vpack.c.b16 %v363, %v363
      %v366 = vpack.c.b16 %v364, %v364
      %vm367 = vcmask 64512
      %v369 = vsel %vm367, %v361, 0
      %vm371 = vcmask 1043456
      %v373 = vsel %vm371, %v365, 0
      %v376 = vsel %vm371, %v366, 0
      %378 = vmatpush.bf16.msra.mxu0 0
      %379 = vmatpush.bf16.msra.mxu0 0
      %380 = vmatpush.bf16.msra.mxu0 0
      %381 = vmatpush.bf16.msra.mxu0 0
      %382 = vmatpush.bf16.msra.mxu0 0
      %383 = vmatpush.bf16.msra.mxu0 0
      %384 = vmatpush.bf16.msra.mxu0 0
      %385 = vmatpush.bf16.msra.mxu0 %v373
      %386 = vmatmul.bf16.gmra.mxu0 %v369
      %v387 = vpop.f32.mrf.mxu0
      %v388 = vadd.f32 0.0, %v387
      %v389 = vpop.f32.mrf.mxu0
      %v390 = vadd.f32 0.0, %v389
      %391 = vdwg.mxu0
      %392 = vmatpush.bf16.msra.mxu0 0
      %393 = vmatpush.bf16.msra.mxu0 0
      %394 = vmatpush.bf16.msra.mxu0 0
      %395 = vmatpush.bf16.msra.mxu0 0
      %396 = vmatpush.bf16.msra.mxu0 0
      %397 = vmatpush.bf16.msra.mxu0 0
      %398 = vmatpush.bf16.msra.mxu0 0
      %399 = vmatpush.bf16.msra.mxu0 %v376
      %400 = vmatmul.bf16.gmra.mxu0 %v369
      %v401 = vpop.f32.mrf.mxu0
      %v402 = vadd.f32 0.0, %v401
      %v403 = vpop.f32.mrf.mxu0
      %v404 = vadd.f32 0.0, %v403
      %405 = vdwg.mxu0
      %v406 = vld [vmem:[%s307] sm:$0xff]
      %v407 = vld [vmem:[%s317] sm:$0xff]
      %v408 = vld [vmem:[%s317 + $0x8] sm:$0xff]
      %v409 = vld [vmem:[%s317 + $0x10] sm:$0xff]
      %v410 = vld [vmem:[%s317 + $0x18] sm:$0xff]
      %v411 = vld [vmem:[%s317 + $0x20] sm:$0xff]
      %v412 = vld [vmem:[%s317 + $0x28] sm:$0xff]
      %v413 = vld [vmem:[%s317 + $0x30] sm:$0xff]
      %v414 = vld [vmem:[%s317 + $0x38] sm:$0xff]
      %v415 = vld [vmem:[%s317 + $0x40] sm:$0xff]
      %v416 = vld [vmem:[%s317 + $0x48] sm:$0xff]
      %v417 = vld [vmem:[%s317 + $0x50] sm:$0xff]
      %v418 = vld [vmem:[%s317 + $0x58] sm:$0xff]
      %v419 = vld [vmem:[%s317 + $0x60] sm:$0xff]
      %v420 = vld [vmem:[%s317 + $0x68] sm:$0xff]
      %v421 = vld [vmem:[%s317 + $0x70] sm:$0xff]
      %v422 = vld [vmem:[%s317 + $0x78] sm:$0xff]
      %v423 = vld [vmem:[%s317 + $0x80] sm:$0xff]
      %v424 = vld [vmem:[%s317 + $0x88] sm:$0xff]
      %v425 = vld [vmem:[%s317 + $0x90] sm:$0xff]
      %v426 = vld [vmem:[%s317 + $0x98] sm:$0xff]
      %v427 = vld [vmem:[%s317 + $0xa0] sm:$0xff]
      %v428 = vld [vmem:[%s317 + $0xa8] sm:$0xff]
      %v429 = vld [vmem:[%s317 + $0xb0] sm:$0xff]
      %v430 = vld [vmem:[%s317 + $0xb8] sm:$0xff]
      %v431 = vld [vmem:[%s317 + $0xc0] sm:$0xff]
      %v432 = vld [vmem:[%s317 + $0xc8] sm:$0xff]
      %v433 = vld [vmem:[%s317 + $0xd0] sm:$0xff]
      %v434 = vld [vmem:[%s317 + $0xd8] sm:$0xff]
      %v435 = vld [vmem:[%s317 + $0xe0] sm:$0xff]
      %v436 = vld [vmem:[%s317 + $0xe8] sm:$0xff]
      %v437 = vld [vmem:[%s317 + $0xf0] sm:$0xff]
      %v438 = vld [vmem:[%s317 + $0xf8] sm:$0xff]
      %v440 = vunpack.c.l.b16 %v406
      %v441 = vunpack.c.h.b16 %v406
      %v442 = vpack.c.b16 %v440, %v440
      %v443 = vpack.c.b16 %v441, %v441
      %v478 = vunpack.c.l.b16 %v407
      %v479 = vunpack.c.h.b16 %v407
      %v480 = vunpack.c.l.b16 %v408
      %v481 = vunpack.c.h.b16 %v408
      %v482 = vunpack.c.l.b16 %v409
      %v483 = vunpack.c.h.b16 %v409
      %v484 = vunpack.c.l.b16 %v410
      %v485 = vunpack.c.h.b16 %v410
      %v486 = vunpack.c.l.b16 %v411
      %v487 = vunpack.c.h.b16 %v411
      %v488 = vunpack.c.l.b16 %v412
      %v489 = vunpack.c.h.b16 %v412
      %v490 = vunpack.c.l.b16 %v413
      %v491 = vunpack.c.h.b16 %v413
      %v492 = vunpack.c.l.b16 %v414
      %v493 = vunpack.c.h.b16 %v414
      %v494 = vunpack.c.l.b16 %v415
      %v495 = vunpack.c.h.b16 %v415
      %v496 = vunpack.c.l.b16 %v416
      %v497 = vunpack.c.h.b16 %v416
      %v498 = vunpack.c.l.b16 %v417
      %v499 = vunpack.c.h.b16 %v417
      %v500 = vunpack.c.l.b16 %v418
      %v501 = vunpack.c.h.b16 %v418
      %v502 = vunpack.c.l.b16 %v419
      %v503 = vunpack.c.h.b16 %v419
      %v504 = vunpack.c.l.b16 %v420
      %v505 = vunpack.c.h.b16 %v420
      %v506 = vunpack.c.l.b16 %v421
      %v507 = vunpack.c.h.b16 %v421
      %v508 = vunpack.c.l.b16 %v422
      %v509 = vunpack.c.h.b16 %v422
      %v510 = vunpack.c.l.b16 %v423
      %v511 = vunpack.c.h.b16 %v423
      %v512 = vunpack.c.l.b16 %v424
      %v513 = vunpack.c.h.b16 %v424
      %v514 = vunpack.c.l.b16 %v425
      %v515 = vunpack.c.h.b16 %v425
      %v516 = vunpack.c.l.b16 %v426
      %v517 = vunpack.c.h.b16 %v426
      %v518 = vunpack.c.l.b16 %v427
      %v519 = vunpack.c.h.b16 %v427
      %v520 = vunpack.c.l.b16 %v428
      %v521 = vunpack.c.h.b16 %v428
      %v522 = vunpack.c.l.b16 %v429
      %v523 = vunpack.c.h.b16 %v429
      %v524 = vunpack.c.l.b16 %v430
      %v525 = vunpack.c.h.b16 %v430
      %v526 = vunpack.c.l.b16 %v431
      %v527 = vunpack.c.h.b16 %v431
      %v528 = vunpack.c.l.b16 %v432
      %v529 = vunpack.c.h.b16 %v432
      %v530 = vunpack.c.l.b16 %v433
      %v531 = vunpack.c.h.b16 %v433
      %v532 = vunpack.c.l.b16 %v434
      %v533 = vunpack.c.h.b16 %v434
      %v534 = vunpack.c.l.b16 %v435
      %v535 = vunpack.c.h.b16 %v435
      %v536 = vunpack.c.l.b16 %v436
      %v537 = vunpack.c.h.b16 %v436
      %v538 = vunpack.c.l.b16 %v437
      %v539 = vunpack.c.h.b16 %v437
      %v540 = vunpack.c.l.b16 %v438
      %v541 = vunpack.c.h.b16 %v438
      %v542 = vpack.c.b16 %v480, %v478
      %v543 = vpack.c.b16 %v481, %v479
      %v544 = vpack.c.b16 %v484, %v482
      %v545 = vpack.c.b16 %v485, %v483
      %v546 = vpack.c.b16 %v488, %v486
      %v547 = vpack.c.b16 %v489, %v487
      %v548 = vpack.c.b16 %v492, %v490
      %v549 = vpack.c.b16 %v493, %v491
      %v550 = vpack.c.b16 %v496, %v494
      %v551 = vpack.c.b16 %v497, %v495
      %v552 = vpack.c.b16 %v500, %v498
      %v553 = vpack.c.b16 %v501, %v499
      %v554 = vpack.c.b16 %v504, %v502
      %v555 = vpack.c.b16 %v505, %v503
      %v556 = vpack.c.b16 %v508, %v506
      %v557 = vpack.c.b16 %v509, %v507
      %v558 = vpack.c.b16 %v512, %v510
      %v559 = vpack.c.b16 %v513, %v511
      %v560 = vpack.c.b16 %v516, %v514
      %v561 = vpack.c.b16 %v517, %v515
      %v562 = vpack.c.b16 %v520, %v518
      %v563 = vpack.c.b16 %v521, %v519
      %v564 = vpack.c.b16 %v524, %v522
      %v565 = vpack.c.b16 %v525, %v523
      %v566 = vpack.c.b16 %v528, %v526
      %v567 = vpack.c.b16 %v529, %v527
      %v568 = vpack.c.b16 %v532, %v530
      %v569 = vpack.c.b16 %v533, %v531
      %v570 = vpack.c.b16 %v536, %v534
      %v571 = vpack.c.b16 %v537, %v535
      %v572 = vpack.c.b16 %v540, %v538
      %v573 = vpack.c.b16 %v541, %v539
      %606 = vmatpush.bf16.xpose.msra.mxu0 %v556
      %607 = vmatpush.bf16.xpose.msra.mxu0 %v554
      %608 = vmatpush.bf16.xpose.msra.mxu0 %v552
      %609 = vmatpush.bf16.xpose.msra.mxu0 %v550
      %610 = vmatpush.bf16.xpose.msra.mxu0 %v548
      %611 = vmatpush.bf16.xpose.msra.mxu0 %v546
      %612 = vmatpush.bf16.xpose.msra.mxu0 %v544
      %613 = vmatpush.bf16.xpose.msra.mxu0 %v542
      %614 = vmatmul.bf16.gmra.mxu0 %v442
      %v615 = vpop.f32.mrf.mxu0
      %v616 = vadd.f32 0.0, %v615
      %v617 = vpop.f32.mrf.mxu0
      %618 = vdwg.mxu0
      %619 = vmatpush.bf16.xpose.msra.mxu0 %v557
      %620 = vmatpush.bf16.xpose.msra.mxu0 %v555
      %621 = vmatpush.bf16.xpose.msra.mxu0 %v553
      %622 = vmatpush.bf16.xpose.msra.mxu0 %v551
      %623 = vmatpush.bf16.xpose.msra.mxu0 %v549
      %624 = vmatpush.bf16.xpose.msra.mxu0 %v547
      %625 = vmatpush.bf16.xpose.msra.mxu0 %v545
      %626 = vmatpush.bf16.xpose.msra.mxu0 %v543
      %627 = vmatmul.bf16.gmra.mxu0 %v443
      %v628 = vpop.f32.mrf.mxu0
      %v629 = vadd.f32 %v616, %v628
      %v630 = vpop.f32.mrf.mxu0
      %631 = vdwg.mxu0
      %632 = vmatpush.bf16.xpose.msra.mxu0 %v572
      %633 = vmatpush.bf16.xpose.msra.mxu0 %v570
      %634 = vmatpush.bf16.xpose.msra.mxu0 %v568
      %635 = vmatpush.bf16.xpose.msra.mxu0 %v566
      %636 = vmatpush.bf16.xpose.msra.mxu0 %v564
      %637 = vmatpush.bf16.xpose.msra.mxu0 %v562
      %638 = vmatpush.bf16.xpose.msra.mxu0 %v560
      %639 = vmatpush.bf16.xpose.msra.mxu0 %v558
      %640 = vmatmul.bf16.gmra.mxu0 %v442
      %v641 = vpop.f32.mrf.mxu0
      %v642 = vadd.f32 0.0, %v641
      %v643 = vpop.f32.mrf.mxu0
      %644 = vdwg.mxu0
      %645 = vmatpush.bf16.xpose.msra.mxu0 %v573
      %646 = vmatpush.bf16.xpose.msra.mxu0 %v571
      %647 = vmatpush.bf16.xpose.msra.mxu0 %v569
      %648 = vmatpush.bf16.xpose.msra.mxu0 %v567
      %649 = vmatpush.bf16.xpose.msra.mxu0 %v565
      %650 = vmatpush.bf16.xpose.msra.mxu0 %v563
      %651 = vmatpush.bf16.xpose.msra.mxu0 %v561
      %652 = vmatpush.bf16.xpose.msra.mxu0 %v559
      %653 = vmatmul.bf16.gmra.mxu0 %v443
      %v654 = vpop.f32.mrf.mxu0
      %v655 = vadd.f32 %v642, %v654
      %v656 = vpop.f32.mrf.mxu0
      %657 = vdwg.mxu0
      %v658 = vld [vmem:[%s3] sm:$0xf]
      %v659 = vld [vmem:[%s3 + $0x4] sm:$0xf]
      %v660 = vpack.c.bf16 %v629, %v629
      %v661 = vpack.c.bf16 %v655, %v655
      %v664 = vunpack.c.l.b16 %v658
      %v665 = vunpack.c.l.b16 %v659
      %v666 = vpack.c.b16 %v665, %v664
      %v668 = vsel %vm367, %v666, 0
      %v671 = vsel %vm371, %v660, 0
      %v674 = vsel %vm371, %v661, 0
      %676 = vmatpush.bf16.msra.mxu0 0
      %677 = vmatpush.bf16.msra.mxu0 0
      %678 = vmatpush.bf16.msra.mxu0 0
      %679 = vmatpush.bf16.msra.mxu0 0
      %680 = vmatpush.bf16.msra.mxu0 0
      %681 = vmatpush.bf16.msra.mxu0 0
      %682 = vmatpush.bf16.msra.mxu0 0
      %683 = vmatpush.bf16.msra.mxu0 %v671
      %684 = vmatmul.bf16.gmra.mxu0 %v668
      %v685 = vpop.f32.mrf.mxu0
      %v686 = vadd.f32 0.0, %v685
      %v687 = vpop.f32.mrf.mxu0
      %v688 = vadd.f32 0.0, %v687
      %689 = vdwg.mxu0
      %690 = vmatpush.bf16.msra.mxu0 0
      %691 = vmatpush.bf16.msra.mxu0 0
      %692 = vmatpush.bf16.msra.mxu0 0
      %693 = vmatpush.bf16.msra.mxu0 0
      %694 = vmatpush.bf16.msra.mxu0 0
      %695 = vmatpush.bf16.msra.mxu0 0
      %696 = vmatpush.bf16.msra.mxu0 0
      %697 = vmatpush.bf16.msra.mxu0 %v674
      %698 = vmatmul.bf16.gmra.mxu0 %v668
      %v699 = vpop.f32.mrf.mxu0
      %v700 = vadd.f32 0.0, %v699
      %v701 = vpop.f32.mrf.mxu0
      %v702 = vadd.f32 0.0, %v701
      %703 = vdwg.mxu0
      %v704 = vsub.f32 %v388, %v686
      %v705 = vsub.f32 %v402, %v700
      %v706 = vsub.f32 %v390, %v688
      %v707 = vsub.f32 %v404, %v702
      %v708 = vpack.c.bf16 %v705, %v704
      %v709 = vpack.c.bf16 %v707, %v706
      %710 = vst [vmem:[%s327] sm:$0xff] %v708
      %711 = vst [vmem:[%s327 + $0x8] sm:$0xff] %v709
      %v712 = vld [vmem:[%s333] sm:$0xff]
      %v713 = vld [vmem:[%s333 + $0x8] sm:$0xff]
      %v714 = vadd.f32 %v704, %v705
      %715 = vadd.xlane.f32.xlu0 %v714
      %v716 = vpop.xlane.xlu0 %715
      %v717 = vadd.f32 %v706, %v707
      %718 = vadd.xlane.f32.xlu0 %v717
      %v719 = vpop.xlane.xlu0 %718
      %v720 = vadd.f32 %v712, %v716
      %v721 = vadd.f32 %v713, %v719
      %vm722 = vcmask 7168
      %723 = vst.msk [vmem:[%s333] sm:$0xff] %vm722, %v720
      %724 = vst.msk [vmem:[%s333 + $0x8] sm:$0xff] %vm722, %v721
      %v725 = vld [vmem:[%s338] sm:$0xff]
      %v726 = vld [vmem:[%s338 + $0x8] sm:$0xff]
      %v727 = vmul.f32 %v704, %v704
      %v728 = vmul.f32 %v705, %v705
      %v729 = vmul.f32 %v706, %v706
      %v730 = vmul.f32 %v707, %v707
      %v731 = vadd.f32 %v727, %v728
      %732 = vadd.xlane.f32.xlu0 %v731
      %v733 = vpop.xlane.xlu0 %732
      %v734 = vadd.f32 %v729, %v730
      %735 = vadd.xlane.f32.xlu0 %v734
      %v736 = vpop.xlane.xlu0 %735
      %v737 = vadd.f32 %v725, %v733
      %v738 = vadd.f32 %v726, %v736
      %739 = vst.msk [vmem:[%s338] sm:$0xff] %vm722, %v737
      %740 = vst.msk [vmem:[%s338 + $0x8] sm:$0xff] %vm722, %v738
      %s741 = smul.u32 2, %s23
      %p742 = scmp.lt.s32.totalorder %s22, 1
      %s743 = scalar_select %p742, %s22, 1
      %p744 = scmp.lt.s32.totalorder %s741, 1
      %s745 = scalar_select %p744, %s741, 1
      %s746 = smul.addr %s743, 4
      %s747 = sadd.s32 %s745, %s746
      %s748 = smul.addr %s747, 4
      %s749 = scalar_lea.vmem %s4, %s748
      %p750 = scmp.lt.s32.totalorder %s22, 1
      %s751 = scalar_select %p750, %s22, 1
      %s752 = smul.addr %s751, 2
      %s753 = smul.addr %s752, 8
      %s754 = scalar_lea.vmem %s5, %s753
      %p755 = scmp.lt.s32.totalorder %s22, 1
      %s756 = scalar_select %p755, %s22, 1
      %s757 = smul.addr %s756, 2
      %s758 = smul.addr %s757, 8
      %s759 = scalar_lea.vmem %s6, %s758
      // Predicated region
      $region41: #{snl_forward.2} parent=35 // pred_check
        %p760 = pneg %p146
      $region42: #{snl_forward.2} parent=35 // pred_check_branch
        %762 = sbr.rel (%p760) target = $region44
      $region43: #{snl_forward.2} parent=35 // pred_region
        %s763 = smul.u32 2, %s23
      $region44: #{snl_forward.2} parent=35 // pred_fallthru
        _
      // Predicated region
      $region45: #{snl_forward.2} parent=35 // pred_check
        %p764 = pneg %p172
      $region46: #{snl_forward.2} parent=35 // pred_check_branch
        %766 = sbr.rel (%p764) target = $region48
      $region47: #{snl_forward.2} parent=35 // pred_region
        _
      $region48: #{snl_forward.2} parent=35 // pred_fallthru
        _
      // Predicated region
      $region49: #{snl_forward.2} parent=35 // pred_check
        %p767 = pneg %p198
      $region50: #{snl_forward.2} parent=35 // pred_check_branch
        %769 = sbr.rel (%p767) target = $region52
      $region51: #{snl_forward.2} parent=35 // pred_region
        _
      $region52: #{snl_forward.2} parent=35 // pred_fallthru
        _
    $region36: #{snl_forward.2} parent=5 // pred_fallthru
      _
    %p770 = scmp.le.s32.totalorder 2, %s13
    // Predicated region
    $region53: #{snl_forward.2} parent=5 // pred_check
      %p771 = pneg %p770
    $region54: #{snl_forward.2} parent=5 // pred_check_branch
      %773 = sbr.rel (%p771) target = $region56
    $region55: #{snl_forward.2} parent=5 // pred_region
      %s774 = ssub.s32 %s13, 2
      // Predicated region
      $region57: #{snl_forward.2} parent=55 // pred_check
        %p775 = pneg %p152
      $region58: #{snl_forward.2} parent=55 // pred_check_branch
        %777 = sbr.rel (%p775) target = $region60
      $region59: #{snl_forward.2} parent=55 // pred_region
        %s778 = smul.u32 2, %s25
        %p779 = scmp.lt.s32.totalorder %s24, 1
        %s780 = scalar_select %p779, %s24, 1
        %p781 = scmp.lt.s32.totalorder %s778, 1
        %s782 = scalar_select %p781, %s778, 1
        %s783 = smul.addr %s780, 4
        %s784 = sadd.s32 %s782, %s783
        %s785 = smul.addr %s784, 4
        %s786 = scalar_lea.vmem %s4, %s785
      $region60: #{snl_forward.2} parent=55 // pred_fallthru
        _
      // Predicated region
      $region61: #{snl_forward.2} parent=55 // pred_check
        %p787 = pneg %p178
      $region62: #{snl_forward.2} parent=55 // pred_check_branch
        %789 = sbr.rel (%p787) target = $region64
      $region63: #{snl_forward.2} parent=55 // pred_region
        %p790 = scmp.lt.s32.totalorder %s24, 1
        %s791 = scalar_select %p790, %s24, 1
        %s792 = smul.addr %s791, 2
        %s793 = smul.addr %s792, 8
        %s794 = scalar_lea.vmem %s5, %s793
      $region64: #{snl_forward.2} parent=55 // pred_fallthru
        _
      // Predicated region
      $region65: #{snl_forward.2} parent=55 // pred_check
        %p795 = pneg %p204
      $region66: #{snl_forward.2} parent=55 // pred_check_branch
        %797 = sbr.rel (%p795) target = $region68
      $region67: #{snl_forward.2} parent=55 // pred_region
        %p798 = scmp.lt.s32.totalorder %s24, 1
        %s799 = scalar_select %p798, %s24, 1
        %s800 = smul.addr %s799, 2
        %s801 = smul.addr %s800, 8
        %s802 = scalar_lea.vmem %s6, %s801
      $region68: #{snl_forward.2} parent=55 // pred_fallthru
        _
    $region56: #{snl_forward.2} parent=5 // pred_fallthru
      _
  $region6: #{snl_forward.2} parent=0 // loop_footer
    %s17 = sadd.s32 1, %s13
  $region7: #{snl_forward.2} parent=0 // loop_footer_branch
    %12 = sbr.rel target = $region3
  $region8: #{snl_forward.2} parent=0 // loop_exit
    _

</llo_original>
